<compile_context>
chip_gen: v7x
topology: tpu7x:2x2x1
jax: 0.10.0
libtpu: 0.0.40
codegen_flags: <defaults>
</compile_context>

<pallas_src>
import jax
import jax.numpy as jnp
from jax.experimental import pallas as pl
from jax.experimental.pallas import tpu as pltpu


def _round_up(x, m):
    return ((x + m - 1) // m) * m


def _make_phi_kernel(n_linear, tm, n_rows, ragged):
    """Kernel for `n_linear` (Linear -> ReLU) stages (== n_layers)."""

    def kernel(*refs):
        x_ref = refs[0]
        o_ref = refs[-1]
        wb_refs = refs[1:-1]                            # alternating (w, b) pairs, all f32

        x = x_ref[...]                                  # (tm, M) f32
        if ragged:
            # Zero out-of-range rows of the last (partial) tile: deterministic,
            # and their (discarded) outputs become exact zeros.
            row = (pl.program_id(0) * tm
                   + jax.lax.broadcasted_iota(jnp.int32, (tm, 1), 0))
            x = jnp.where(row < n_rows, x, 0.0)

        c = jnp.sum(x, axis=-1, keepdims=True)          # (tm, 1) f32-exact row sums
        inv_c = pl.reciprocal(c, approx=True)           # EUP slot; 1/0 -> inf preserved
        p = x * inv_c
        p = jnp.where(jnp.isnan(p), 0.0, p)             # P_[P_ != P_] = 0  (0/0 -> 0)

        h = p
        for l in range(n_linear):
            w = wb_refs[2 * l][...]                     # (in, out)  f32, VMEM-resident
            b = wb_refs[2 * l + 1][...]                 # (1, out)   f32
            h = jnp.dot(h, w, preferred_element_type=jnp.float32)
            h = jnp.maximum(h + b, 0.0)                 # ReLU after every Linear

        o_ref[...] = (h * c).astype(o_ref.dtype)

    return kernel


def phi_forward(P, params, *, tm=8192):
    """P: (B, N, M) float32 -> (B, N, output_dim) float32."""
    B, N, M = P.shape
    n_linear = len(params) // 2
    out_dim = params[-2].shape[1]

    R = B * N
    x = P.reshape(R, M)                                 # f32 straight into the kernel

    # Keep the tile sublane-aligned (f32 -> multiple of 8) and ensure the grid
    # has >= 2 steps so both v7x TensorCores are used.
    tm_cap = _round_up(max(1, -(-R // 2)), 8)
    tm = max(8, min(tm, tm_cap))
    grid = (pl.cdiv(R, tm),)
    ragged = (R % tm) != 0                              # ragged tail handled in-kernel

    in_specs = [pl.BlockSpec((tm, M), lambda i: (i, 0))]
    for arr in params:                                  # weights/biases: resident blocks
        in_specs.append(pl.BlockSpec(arr.shape, lambda i: (0, 0)))

    out = pl.pallas_call(
        _make_phi_kernel(n_linear, tm, R, ragged),
        out_shape=jax.ShapeDtypeStruct((R, out_dim), jnp.float32),
        grid=grid,
        in_specs=in_specs,
        out_specs=pl.BlockSpec((tm, out_dim), lambda i: (i, 0)),
        compiler_params=pltpu.CompilerParams(
            dimension_semantics=("parallel",),          # megacore-shardable on v7x
            vmem_limit_bytes=32 * 1024 * 1024),         # lane-padded blocks @ tm=8192
    )(x, *params)

    return out.reshape(B, N, out_dim)


def init_phi_params(key, input_dim, hidden_dim=32, output_dim=10, n_layers=2):
    """nn.Linear-style init (U[-1/sqrt(fan_in), +]); weights stored f32 as (in, out)."""
    dims = [input_dim] + [hidden_dim] * (n_layers - 1) + [output_dim]
    ks = jax.random.split(key, 2 * n_layers)
    params = []
    for l in range(n_layers):
        fan_in, fan_out = dims[l], dims[l + 1]
        bound = 1.0 / jnp.sqrt(float(fan_in))
        w = jax.random.uniform(ks[2 * l], (fan_in, fan_out), jnp.float32, -bound, bound)
        b = jax.random.uniform(ks[2 * l + 1], (1, fan_out), jnp.float32, -bound, bound)
        params += [w, b]
    return tuple(params)


def phi_reference(P, params):
    """Pure-JAX f32 reference matching the PyTorch forward."""
    c = jnp.sum(P, axis=-1, keepdims=True)
    p = P / c
    p = jnp.where(jnp.isnan(p), 0.0, p)
    h = p
    for l in range(len(params) // 2):
        w = params[2 * l]
        b = params[2 * l + 1]
        h = jnp.maximum(h @ w + b, 0.0)
    return h * c


if __name__ == "__main__":
    key = jax.random.PRNGKey(0)
    k_x, k_p = jax.random.split(key)

    B, N, M = 2, 8, 16                 # batch, polymers per blend, monomers (input_dim)
    hidden_dim, output_dim, n_layers = 32, 10, 2

    # Positive monomer-count-like inputs; zero one row to exercise the 0/0 -> 0 path.
    P = jax.random.uniform(k_x, (B, N, M), jnp.float32)
    P = P.at[0, 0, :].set(0.0)

    params = init_phi_params(k_p, M, hidden_dim, output_dim, n_layers)

    out = phi_forward(P, params)
    out = jax.block_until_ready(out)

    ref = phi_reference(P, params)
    assert out.shape == (B, N, output_dim)
    assert bool(jnp.all(jnp.isfinite(out)))
    # f32 everywhere; the only approximation is the EUP reciprocal (~2^-12 rel).
    assert jnp.allclose(out, ref, atol=1e-2, rtol=1e-2), float(jnp.max(jnp.abs(out - ref)))

    print("KERNEL_OK")
</pallas_src>

<mosaic_0001>
module attributes {stable_mosaic.version = 11 : i64} {
  func.func @kernel(%arg0: i32, %arg1: memref<8x16xf32, #tpu.memory_space<vmem>>, %arg2: memref<16x32xf32, #tpu.memory_space<vmem>>, %arg3: memref<1x32xf32, #tpu.memory_space<vmem>>, %arg4: memref<32x10xf32, #tpu.memory_space<vmem>>, %arg5: memref<1x10xf32, #tpu.memory_space<vmem>>, %arg6: memref<8x10xf32, #tpu.memory_space<vmem>>) attributes {dimension_semantics = [#tpu.dimension_semantics<parallel>], iteration_bounds = array<i64: 2>, scalar_prefetch = 0 : i64, scratch_operands = 0 : i64, tpu.core_type = #tpu.core_type<tc>, window_params = [{transform_indices = @transform_0, window_bounds = array<i64: 8, 16>}, {pipeline_mode = #tpu.pipeline_mode<synchronous>, transform_indices = @transform_1, window_bounds = array<i64: 16, 32>}, {pipeline_mode = #tpu.pipeline_mode<synchronous>, transform_indices = @transform_2, window_bounds = array<i64: 1, 32>}, {pipeline_mode = #tpu.pipeline_mode<synchronous>, transform_indices = @transform_3, window_bounds = array<i64: 32, 10>}, {pipeline_mode = #tpu.pipeline_mode<synchronous>, transform_indices = @transform_4, window_bounds = array<i64: 1, 10>}, {transform_indices = @transform_5, window_bounds = array<i64: 8, 10>}]} {
    %c0 = arith.constant 0 : index
    %c0_0 = arith.constant 0 : index
    %0 = vector.load %arg1[%c0, %c0_0] : memref<8x16xf32, #tpu.memory_space<vmem>>, vector<8x16xf32>
    %cst = arith.constant dense<0.000000e+00> : vector<8xf32>
    %1 = vector.multi_reduction <add>, %0, %cst [1] : vector<8x16xf32> to vector<8xf32>
    %2 = vector.shape_cast %1 : vector<8xf32> to vector<8x1xf32>
    %3 = tpu.reciprocal %2 {approx = true} : vector<8x1xf32> -> vector<8x1xf32>
    %4 = vector.broadcast %3 : vector<8x1xf32> to vector<8x16xf32>
    %5 = arith.mulf %0, %4 : vector<8x16xf32>
    %6 = arith.cmpf one, %5, %5 : vector<8x16xf32>
    %cst_1 = arith.constant 0.000000e+00 : f32
    %7 = vector.broadcast %cst_1 : f32 to vector<8x16xf32>
    %8 = arith.select %6, %7, %5 : vector<8x16xi1>, vector<8x16xf32>
    %c0_2 = arith.constant 0 : index
    %c0_3 = arith.constant 0 : index
    %9 = vector.load %arg2[%c0_2, %c0_3] : memref<16x32xf32, #tpu.memory_space<vmem>>, vector<16x32xf32>
    %c0_4 = arith.constant 0 : index
    %c0_5 = arith.constant 0 : index
    %10 = vector.load %arg3[%c0_4, %c0_5] : memref<1x32xf32, #tpu.memory_space<vmem>>, vector<1x32xf32>
    %cst_6 = arith.constant dense<0.000000e+00> : vector<8x32xf32>
    %11 = tpu.matmul %8, %9, %cst_6 {dimension_numbers = #tpu.dot_dimension_numbers<[1], [0], [0], [1], [0, 0, 1, 1], [], []>} : vector<8x16xf32>, vector<16x32xf32>, vector<8x32xf32> -> vector<8x32xf32>
    %12 = vector.broadcast %10 : vector<1x32xf32> to vector<8x32xf32>
    %13 = arith.addf %11, %12 : vector<8x32xf32>
    %cst_7 = arith.constant 0.000000e+00 : f32
    %14 = vector.broadcast %cst_7 : f32 to vector<8x32xf32>
    %15 = arith.maximumf %13, %14 : vector<8x32xf32>
    %c0_8 = arith.constant 0 : index
    %c0_9 = arith.constant 0 : index
    %16 = vector.load %arg4[%c0_8, %c0_9] : memref<32x10xf32, #tpu.memory_space<vmem>>, vector<32x10xf32>
    %c0_10 = arith.constant 0 : index
    %c0_11 = arith.constant 0 : index
    %17 = vector.load %arg5[%c0_10, %c0_11] : memref<1x10xf32, #tpu.memory_space<vmem>>, vector<1x10xf32>
    %cst_12 = arith.constant dense<0.000000e+00> : vector<8x10xf32>
    %18 = tpu.matmul %15, %16, %cst_12 {dimension_numbers = #tpu.dot_dimension_numbers<[1], [0], [0], [1], [0, 0, 1, 1], [], []>} : vector<8x32xf32>, vector<32x10xf32>, vector<8x10xf32> -> vector<8x10xf32>
    %19 = vector.broadcast %17 : vector<1x10xf32> to vector<8x10xf32>
    %20 = arith.addf %18, %19 : vector<8x10xf32>
    %cst_13 = arith.constant 0.000000e+00 : f32
    %21 = vector.broadcast %cst_13 : f32 to vector<8x10xf32>
    %22 = arith.maximumf %20, %21 : vector<8x10xf32>
    %23 = vector.broadcast %2 : vector<8x1xf32> to vector<8x10xf32>
    %24 = arith.mulf %22, %23 : vector<8x10xf32>
    %c0_14 = arith.constant 0 : index
    %c0_15 = arith.constant 0 : index
    %25 = vector.load %arg6[%c0_14, %c0_15] : memref<8x10xf32, #tpu.memory_space<vmem>>, vector<8x10xf32>
    tpu.vector_store %arg6[%c0_14, %c0_15], %24 {strides = array<i32>} : memref<8x10xf32, #tpu.memory_space<vmem>>, vector<8x10xf32>,
    return
  }
  func.func @transform_0(%arg0: i32) -> (i32, i32) {
    %c0_i32 = arith.constant 0 : i32
    %c0_i32_0 = arith.constant 0 : i32
    return %arg0, %c0_i32 : i32, i32
  }
  func.func @transform_1(%arg0: i32) -> (i32, i32) {
    %c0_i32 = arith.constant 0 : i32
    %c0_i32_0 = arith.constant 0 : i32
    %c0_i32_1 = arith.constant 0 : i32
    return %c0_i32, %c0_i32_0 : i32, i32
  }
  func.func @transform_2(%arg0: i32) -> (i32, i32) {
    %c0_i32 = arith.constant 0 : i32
    %c0_i32_0 = arith.constant 0 : i32
    %c0_i32_1 = arith.constant 0 : i32
    return %c0_i32, %c0_i32_0 : i32, i32
  }
  func.func @transform_3(%arg0: i32) -> (i32, i32) {
    %c0_i32 = arith.constant 0 : i32
    %c0_i32_0 = arith.constant 0 : i32
    %c0_i32_1 = arith.constant 0 : i32
    return %c0_i32, %c0_i32_0 : i32, i32
  }
  func.func @transform_4(%arg0: i32) -> (i32, i32) {
    %c0_i32 = arith.constant 0 : i32
    %c0_i32_0 = arith.constant 0 : i32
    %c0_i32_1 = arith.constant 0 : i32
    return %c0_i32, %c0_i32_0 : i32, i32
  }
  func.func @transform_5(%arg0: i32) -> (i32, i32) {
    %c0_i32 = arith.constant 0 : i32
    %c0_i32_0 = arith.constant 0 : i32
    return %arg0, %c0_i32 : i32, i32
  }
}

</mosaic_0001>

<llo_original>
// kernel: tpu_custom_call.1
$region0: #{tpu_custom_call.1}
  #allocation0 [shape = 'u32[]', space=smem, size = 0x4, offset = 0x4, fixed_abs, tag = 'smem constant byte address 0x4 - core index']
  #allocation1 [shape = 'u32[144,128]{1,0:T(1,128)}', space=vmem, size = 0x12000, scoped, tag = 'internal scratch']
  %s0 = inlined_call_operand.vmem [shape: f32[16,16], index: 0, kind: input, shape index: {}]
  %s1 = inlined_call_operand.vmem [shape: f32[16,32], index: 1, kind: input, shape index: {}]
  %s2 = inlined_call_operand.vmem [shape: f32[1,32], index: 2, kind: input, shape index: {}]
  %s3 = inlined_call_operand.vmem [shape: f32[32,10], index: 3, kind: input, shape index: {}]
  %s4 = inlined_call_operand.vmem [shape: f32[1,10], index: 4, kind: input, shape index: {}]
  %s5 = inlined_call_operand.hbm [shape: f32[16,10], index: 5, kind: output, shape index: {}]
  %s6 = sld [smem:[#allocation0]]
  $region53: #{tpu_custom_call.1} parent=0
    _
  %s8 = ssub.s32 1, %s6
  %s9 = scalar_select 0, %s8, %s6
  $region1: #{tpu_custom_call.1} parent=0
    #allocation2 [shape = 'u8[8192]{0}', space=vmem, size = 0x2000, scoped, tag = 'output window, operand 0']
    #allocation3 [shape = 's32[2]{0}', space=sflag, size = 0x8, scoped, tag = 'scoped memory for tpu_custom_call.1']
    %10 = vsyncpa [#allocation3], 0
    %s11 = scalar_lea.sflag [#allocation3], 1
    %12 = vsyncpa %s11, 0
    loop: start=0, step=1, limit=4
    $region2: #{tpu_custom_call.1} parent=1 // loop_pre_header
      _
    $region3: #{tpu_custom_call.1} parent=1 // loop_header
      %s14 = sphi 0, %s18
      %p15 = scmp.ge.s32.totalorder %s14, 4
      %s24 = sphi 0, %s26
      %s27 = sphi 0, %s24
      %s28 = sphi 0, %s27
      %s44 = sphi 0, %s28
      %s48 = sphi 0, %s48
      %s50 = sphi 0, %s48
      %s51 = sphi 0, %s50
      %s65 = sphi 0, %s51
      %s69 = sphi 0, %s69
      %s71 = sphi 0, %s69
      %s72 = sphi 0, %s71
      %s86 = sphi 0, %s72
      %s90 = sphi 0, %s90
      %s92 = sphi 0, %s90
      %s93 = sphi 0, %s92
      %s107 = sphi 0, %s93
      %s111 = sphi 0, %s111
      %s113 = sphi 0, %s111
      %s114 = sphi 0, %s113
      %s128 = sphi 0, %s114
      %s134 = sphi 0, %s136
      %s137 = sphi 0, %s134
      %s138 = sphi 0, %s137
      %s154 = sphi 0, %s138
    $region4: #{tpu_custom_call.1} parent=1 // loop_header_branch
      %17 = sbr.rel (%p15) target = $region8
    $region5: #{tpu_custom_call.1} parent=1 // loop_body
      %s19 = ssub.s32 %s14, 1
      %s20 = ssub.s32 %s14, 2
      %s21 = sadd.s32 %s14, 1
      %s22 = ssub.s32 %s14, %s21
      %p23 = scmp.eq.s32.totalorder %s22, 0
      %s25 = sadd.s32 %s24, 1
      %s26 = scalar_select %p23, %s24, %s25
      %p29 = pneg %p23
      %p30 = scmp.eq.s32.totalorder %s14, 1
      %p31 = por %p29, %p30
      %p32 = scmp.ne.s32.totalorder %s24, %s27
      %p33 = scmp.eq.s32.totalorder %s14, 0
      %p34 = por %p32, %p33
      %p35 = scmp.ne.s32.totalorder %s24, %s27
      %p36 = scmp.eq.s32.totalorder %s19, 1
      %p37 = por %p35, %p36
      %p38 = scmp.ne.s32.totalorder %s27, %s28
      %p39 = scmp.eq.s32.totalorder %s19, 0
      %p40 = por %p38, %p39
      %p41 = scmp.ne.s32.totalorder %s27, %s28
      %p42 = scmp.eq.s32.totalorder %s20, 1
      %p43 = por %p41, %p42
      %p45 = scmp.ne.s32.totalorder %s28, %s44
      %p46 = scmp.eq.s32.totalorder %s20, 0
      %p47 = por %p45, %p46
      %s49 = sadd.s32 %s48, 1
      %p52 = scmp.eq.s32.totalorder %s14, 1
      %p53 = scmp.ne.s32.totalorder %s48, %s50
      %p54 = scmp.eq.s32.totalorder %s14, 0
      %p55 = por %p53, %p54
      %p56 = scmp.ne.s32.totalorder %s48, %s50
      %p57 = scmp.eq.s32.totalorder %s19, 1
      %p58 = por %p56, %p57
      %p59 = scmp.ne.s32.totalorder %s50, %s51
      %p60 = scmp.eq.s32.totalorder %s19, 0
      %p61 = por %p59, %p60
      %p62 = scmp.ne.s32.totalorder %s50, %s51
      %p63 = scmp.eq.s32.totalorder %s20, 1
      %p64 = por %p62, %p63
      %p66 = scmp.ne.s32.totalorder %s51, %s65
      %p67 = scmp.eq.s32.totalorder %s20, 0
      %p68 = por %p66, %p67
      %s70 = sadd.s32 %s69, 1
      %p73 = scmp.eq.s32.totalorder %s14, 1
      %p74 = scmp.ne.s32.totalorder %s69, %s71
      %p75 = scmp.eq.s32.totalorder %s14, 0
      %p76 = por %p74, %p75
      %p77 = scmp.ne.s32.totalorder %s69, %s71
      %p78 = scmp.eq.s32.totalorder %s19, 1
      %p79 = por %p77, %p78
      %p80 = scmp.ne.s32.totalorder %s71, %s72
      %p81 = scmp.eq.s32.totalorder %s19, 0
      %p82 = por %p80, %p81
      %p83 = scmp.ne.s32.totalorder %s71, %s72
      %p84 = scmp.eq.s32.totalorder %s20, 1
      %p85 = por %p83, %p84
      %p87 = scmp.ne.s32.totalorder %s72, %s86
      %p88 = scmp.eq.s32.totalorder %s20, 0
      %p89 = por %p87, %p88
      %s91 = sadd.s32 %s90, 1
      %p94 = scmp.eq.s32.totalorder %s14, 1
      %p95 = scmp.ne.s32.totalorder %s90, %s92
      %p96 = scmp.eq.s32.totalorder %s14, 0
      %p97 = por %p95, %p96
      %p98 = scmp.ne.s32.totalorder %s90, %s92
      %p99 = scmp.eq.s32.totalorder %s19, 1
      %p100 = por %p98, %p99
      %p101 = scmp.ne.s32.totalorder %s92, %s93
      %p102 = scmp.eq.s32.totalorder %s19, 0
      %p103 = por %p101, %p102
      %p104 = scmp.ne.s32.totalorder %s92, %s93
      %p105 = scmp.eq.s32.totalorder %s20, 1
      %p106 = por %p104, %p105
      %p108 = scmp.ne.s32.totalorder %s93, %s107
      %p109 = scmp.eq.s32.totalorder %s20, 0
      %p110 = por %p108, %p109
      %s112 = sadd.s32 %s111, 1
      %p115 = scmp.eq.s32.totalorder %s14, 1
      %p116 = scmp.ne.s32.totalorder %s111, %s113
      %p117 = scmp.eq.s32.totalorder %s14, 0
      %p118 = por %p116, %p117
      %p119 = scmp.ne.s32.totalorder %s111, %s113
      %p120 = scmp.eq.s32.totalorder %s19, 1
      %p121 = por %p119, %p120
      %p122 = scmp.ne.s32.totalorder %s113, %s114
      %p123 = scmp.eq.s32.totalorder %s19, 0
      %p124 = por %p122, %p123
      %p125 = scmp.ne.s32.totalorder %s113, %s114
      %p126 = scmp.eq.s32.totalorder %s20, 1
      %p127 = por %p125, %p126
      %p129 = scmp.ne.s32.totalorder %s114, %s128
      %p130 = scmp.eq.s32.totalorder %s20, 0
      %p131 = por %p129, %p130
      %s132 = ssub.s32 %s14, %s21
      %p133 = scmp.eq.s32.totalorder %s132, 0
      %s135 = sadd.s32 %s134, 1
      %s136 = scalar_select %p133, %s134, %s135
      %p139 = pneg %p133
      %p140 = scmp.eq.s32.totalorder %s14, 1
      %p141 = por %p139, %p140
      %p142 = scmp.ne.s32.totalorder %s134, %s137
      %p143 = scmp.eq.s32.totalorder %s14, 0
      %p144 = por %p142, %p143
      %p145 = scmp.ne.s32.totalorder %s134, %s137
      %p146 = scmp.eq.s32.totalorder %s19, 1
      %p147 = por %p145, %p146
      %p148 = scmp.ne.s32.totalorder %s137, %s138
      %p149 = scmp.eq.s32.totalorder %s19, 0
      %p150 = por %p148, %p149
      %p151 = scmp.ne.s32.totalorder %s137, %s138
      %p152 = scmp.eq.s32.totalorder %s20, 1
      %p153 = por %p151, %p152
      %p155 = scmp.ne.s32.totalorder %s138, %s154
      %p156 = scmp.eq.s32.totalorder %s20, 0
      %p157 = por %p155, %p156
      %p158 = scmp.le.s32.totalorder 1, %s14
      %p159 = scmp.lt.s32.totalorder %s14, 3
      %p160 = pnand %p158, %p159
      %p161 = pneg %p160
      // Predicated region
      $region9: #{tpu_custom_call.1} parent=5 // pred_check
        _
      $region10: #{tpu_custom_call.1} parent=5 // pred_check_branch
        %163 = sbr.rel (%p160) target = $region12
      $region11: #{tpu_custom_call.1} parent=5 // pred_region
        %s164 = ssub.s32 %s14, 1
        // Predicated region
        $region13: #{tpu_custom_call.1} parent=11 // pred_check
          %p165 = pneg %p61
        $region14: #{tpu_custom_call.1} parent=11 // pred_check_branch
          %167 = sbr.rel (%p165) target = $region16
        $region15: #{tpu_custom_call.1} parent=11 // pred_region
          _
        $region16: #{tpu_custom_call.1} parent=11 // pred_fallthru
          _
        // Predicated region
        $region17: #{tpu_custom_call.1} parent=11 // pred_check
          %p168 = pneg %p82
        $region18: #{tpu_custom_call.1} parent=11 // pred_check_branch
          %170 = sbr.rel (%p168) target = $region20
        $region19: #{tpu_custom_call.1} parent=11 // pred_region
          _
        $region20: #{tpu_custom_call.1} parent=11 // pred_fallthru
          _
        // Predicated region
        $region21: #{tpu_custom_call.1} parent=11 // pred_check
          %p171 = pneg %p103
        $region22: #{tpu_custom_call.1} parent=11 // pred_check_branch
          %173 = sbr.rel (%p171) target = $region24
        $region23: #{tpu_custom_call.1} parent=11 // pred_region
          _
        $region24: #{tpu_custom_call.1} parent=11 // pred_fallthru
          _
        // Predicated region
        $region25: #{tpu_custom_call.1} parent=11 // pred_check
          %p174 = pneg %p124
        $region26: #{tpu_custom_call.1} parent=11 // pred_check_branch
          %176 = sbr.rel (%p174) target = $region28
        $region27: #{tpu_custom_call.1} parent=11 // pred_region
          _
        $region28: #{tpu_custom_call.1} parent=11 // pred_fallthru
          _
      $region12: #{tpu_custom_call.1} parent=5 // pred_fallthru
        _
      %p177 = scmp.lt.s32.totalorder %s14, 2
      // Predicated region
      $region29: #{tpu_custom_call.1} parent=5 // pred_check
        %p178 = pneg %p177
      $region30: #{tpu_custom_call.1} parent=5 // pred_check_branch
        %180 = sbr.rel (%p178) target = $region32
      $region31: #{tpu_custom_call.1} parent=5 // pred_region
        // Predicated region
        $region33: #{tpu_custom_call.1} parent=31 // pred_check
          %p181 = pneg %p34
        $region34: #{tpu_custom_call.1} parent=31 // pred_check_branch
          %183 = sbr.rel (%p181) target = $region36
        $region35: #{tpu_custom_call.1} parent=31 // pred_region
          %p184 = scmp.lt.s32.totalorder %s14, 1
          %s185 = scalar_select %p184, %s14, 1
          %s186 = smul.addr %s185, 8
          %s187 = scalar_lea.vmem %s0, %s186
        $region36: #{tpu_custom_call.1} parent=31 // pred_fallthru
          _
      $region32: #{tpu_custom_call.1} parent=5 // pred_fallthru
        _
      %p188 = scmp.le.s32.totalorder 1, %s14
      %p189 = scmp.lt.s32.totalorder %s14, 3
      %p190 = pnand %p188, %p189
      %p191 = pneg %p190
      // Predicated region
      $region37: #{tpu_custom_call.1} parent=5 // pred_check
        _
      $region38: #{tpu_custom_call.1} parent=5 // pred_check_branch
        %193 = sbr.rel (%p190) target = $region40
      $region39: #{tpu_custom_call.1} parent=5 // pred_region
        %s194 = ssub.s32 %s14, 1
        %p195 = scmp.lt.s32.totalorder %s19, 1
        %s196 = scalar_select %p195, %s19, 1
        %s197 = smul.addr %s196, 8
        %s198 = scalar_lea.vmem %s0, %s197
        %p199 = pneg %p40
        %p200 = pneg %p37
        %p201 = pneg %p61
        %p202 = pneg %p58
        %p203 = pneg %p82
        %p204 = pneg %p79
        %p205 = pneg %p103
        %p206 = pneg %p100
        %p207 = pneg %p124
        %p208 = pneg %p121
        %p209 = pneg %p150
        %p210 = pneg %p147
        %s211 = sand.u32 %s137, 1
        %s212 = scalar_lea.sflag [#allocation3], %s211
        %s213 = sand.u32 %s137, 1
        %s214 = smul.addr %s213, 8
        %s215 = scalar_lea.vmem [#allocation2], %s214
        %p216 = scmp.lt.s32.totalorder %s19, 1
        %s217 = scalar_select %p216, %s19, 1
        %s218 = smul.addr %s217, 8
        %s219 = scalar_lea.vmem %s0, %s218
        %v220 = vld [vmem:[%s219] sm:$0xff]
        %vm221 = vcmask 130048
        %v222 = vsel %vm221, %v220, 0.0
        %223 = vadd.xlane.f32.xlu0 %v222
        %v224 = vpop.xlane.xlu0 %223
        %v225 = vrcp.pop %v224
        %v226 = vmul.f32 %v220, %v225
        %vm227 = vcmp.ne.f32.partialorder %v226, %v226
        %v228 = vsel %vm227, 0.0, %v226
        %v229 = vld [vmem:[%s1] sm:$0xff]
        %v230 = vld [vmem:[%s1 + $0x8] sm:$0xff]
        %v231 = vld [vmem:[%s2] sm:$0x1]
        %v233 = vlaneseq
        %v234 = vshrl.u32 %v233, 7
        %v235 = vsub.s32 0, %v234
        %v236 = vrot.slane %v231, %v235
        %v239 = vsel %vm221, %v228, 0
        %241 = vmatprep.subr.mxu0 0.0
        %242 = vmatpush1.msra.mxu0 %v229
        %243 = vmatprep.subr.mxu0 0.0
        %244 = vmatpush1.msra.mxu0 %v230
        %245 = vmatprep.subr.mxu0 0.0
        %246 = vmatpush1.msra.mxu0 0.0
        %247 = vmatprep.subr.mxu0 0.0
        %248 = vmatpush1.msra.mxu0 0.0
        %249 = vmatprep.subr.mxu0 0.0
        %250 = vmatpush1.msra.mxu0 0.0
        %251 = vmatprep.subr.mxu0 0.0
        %252 = vmatpush1.msra.mxu0 0.0
        %253 = vmatprep.subr.mxu0 0.0
        %254 = vmatpush1.msra.mxu0 0.0
        %255 = vmatprep.subr.mxu0 0.0
        %256 = vmatpush1.msra.mxu0 0.0
        %257 = vmatprep.subr.mxu0 0.0
        %258 = vmatpush1.msra.mxu0 0.0
        %259 = vmatprep.subr.mxu0 0.0
        %260 = vmatpush1.msra.mxu0 0.0
        %261 = vmatprep.subr.mxu0 0.0
        %262 = vmatpush1.msra.mxu0 0.0
        %263 = vmatprep.subr.mxu0 0.0
        %264 = vmatpush1.msra.mxu0 0.0
        %265 = vmatprep.subr.mxu0 0.0
        %266 = vmatpush1.msra.mxu0 0.0
        %267 = vmatprep.subr.mxu0 0.0
        %268 = vmatpush1.msra.mxu0 0.0
        %269 = vmatprep.subr.mxu0 0.0
        %270 = vmatpush1.msra.mxu0 0.0
        %271 = vmatprep.subr.mxu0 0.0
        %272 = vmatpush1.msra.mxu0 0.0
        %273 = vmatprep.subr.mxu0 0.0
        %274 = vmatpush1.msra.mxu0 0.0
        %275 = vmatprep.subr.mxu0 0.0
        %276 = vmatpush1.msra.mxu0 0.0
        %277 = vmatprep.subr.mxu0 0.0
        %278 = vmatpush1.msra.mxu0 0.0
        %279 = vmatprep.subr.mxu0 0.0
        %280 = vmatpush1.msra.mxu0 0.0
        %281 = vmatprep.subr.mxu0 0.0
        %282 = vmatpush1.msra.mxu0 0.0
        %283 = vmatprep.subr.mxu0 0.0
        %284 = vmatpush1.msra.mxu0 0.0
        %285 = vmatprep.subr.mxu0 0.0
        %286 = vmatpush1.msra.mxu0 0.0
        %287 = vmatprep.subr.mxu0 0.0
        %288 = vmatpush1.msra.mxu0 0.0
        %289 = vmatprep.subr.mxu0 0.0
        %290 = vmatpush1.msra.mxu0 0.0
        %291 = vmatprep.subr.mxu0 0.0
        %292 = vmatpush1.msra.mxu0 0.0
        %293 = vmatprep.subr.mxu0 0.0
        %294 = vmatpush1.msra.mxu0 0.0
        %295 = vmatprep.subr.mxu0 0.0
        %296 = vmatpush1.msra.mxu0 0.0
        %297 = vmatprep.subr.mxu0 0.0
        %298 = vmatpush1.msra.mxu0 0.0
        %299 = vmatprep.subr.mxu0 0.0
        %300 = vmatpush1.msra.mxu0 0.0
        %301 = vmatprep.subr.mxu0 0.0
        %302 = vmatpush1.msra.mxu0 0.0
        %303 = vmatprep.subr.mxu0 0.0
        %304 = vmatpush1.msra.mxu0 0.0
        %305 = vmatprep.mubr.f32.mxu0 0.0
        %306 = vmatmul.mubr.f32.gmra.mrb[0].mxu0 %v239
        %v307 = vpop.f32.mrb[0].mxu0
        %v308 = vadd.f32 %v236, %v307
        %v309 = vpop.f32.mrb[0].mxu0
        %310 = vdwg.mxu0
        %v311 = vmax.f32 %v308, 0.0
        %v312 = vld [vmem:[%s3] sm:$0xff]
        %v313 = vld [vmem:[%s3 + $0x8] sm:$0xff]
        %v314 = vld [vmem:[%s3 + $0x10] sm:$0xff]
        %v315 = vld [vmem:[%s3 + $0x18] sm:$0xff]
        %v316 = vld [vmem:[%s4] sm:$0x1]
        %v318 = vlaneseq
        %v319 = vshrl.u32 %v318, 7
        %v320 = vsub.s32 0, %v319
        %v321 = vrot.slane %v316, %v320
        %vm323 = vcmask 261120
        %v325 = vsel %vm323, %v311, 0
        %327 = vmatprep.subr.mxu0 0.0
        %328 = vmatpush1.msra.mxu0 %v312
        %329 = vmatprep.subr.mxu0 0.0
        %330 = vmatpush1.msra.mxu0 %v313
        %331 = vmatprep.subr.mxu0 0.0
        %332 = vmatpush1.msra.mxu0 %v314
        %333 = vmatprep.subr.mxu0 0.0
        %334 = vmatpush1.msra.mxu0 %v315
        %335 = vmatprep.subr.mxu0 0.0
        %336 = vmatpush1.msra.mxu0 0.0
        %337 = vmatprep.subr.mxu0 0.0
        %338 = vmatpush1.msra.mxu0 0.0
        %339 = vmatprep.subr.mxu0 0.0
        %340 = vmatpush1.msra.mxu0 0.0
        %341 = vmatprep.subr.mxu0 0.0
        %342 = vmatpush1.msra.mxu0 0.0
        %343 = vmatprep.subr.mxu0 0.0
        %344 = vmatpush1.msra.mxu0 0.0
        %345 = vmatprep.subr.mxu0 0.0
        %346 = vmatpush1.msra.mxu0 0.0
        %347 = vmatprep.subr.mxu0 0.0
        %348 = vmatpush1.msra.mxu0 0.0
        %349 = vmatprep.subr.mxu0 0.0
        %350 = vmatpush1.msra.mxu0 0.0
        %351 = vmatprep.subr.mxu0 0.0
        %352 = vmatpush1.msra.mxu0 0.0
        %353 = vmatprep.subr.mxu0 0.0
        %354 = vmatpush1.msra.mxu0 0.0
        %355 = vmatprep.subr.mxu0 0.0
        %356 = vmatpush1.msra.mxu0 0.0
        %357 = vmatprep.subr.mxu0 0.0
        %358 = vmatpush1.msra.mxu0 0.0
        %359 = vmatprep.subr.mxu0 0.0
        %360 = vmatpush1.msra.mxu0 0.0
        %361 = vmatprep.subr.mxu0 0.0
        %362 = vmatpush1.msra.mxu0 0.0
        %363 = vmatprep.subr.mxu0 0.0
        %364 = vmatpush1.msra.mxu0 0.0
        %365 = vmatprep.subr.mxu0 0.0
        %366 = vmatpush1.msra.mxu0 0.0
        %367 = vmatprep.subr.mxu0 0.0
        %368 = vmatpush1.msra.mxu0 0.0
        %369 = vmatprep.subr.mxu0 0.0
        %370 = vmatpush1.msra.mxu0 0.0
        %371 = vmatprep.subr.mxu0 0.0
        %372 = vmatpush1.msra.mxu0 0.0
        %373 = vmatprep.subr.mxu0 0.0
        %374 = vmatpush1.msra.mxu0 0.0
        %375 = vmatprep.subr.mxu0 0.0
        %376 = vmatpush1.msra.mxu0 0.0
        %377 = vmatprep.subr.mxu0 0.0
        %378 = vmatpush1.msra.mxu0 0.0
        %379 = vmatprep.subr.mxu0 0.0
        %380 = vmatpush1.msra.mxu0 0.0
        %381 = vmatprep.subr.mxu0 0.0
        %382 = vmatpush1.msra.mxu0 0.0
        %383 = vmatprep.subr.mxu0 0.0
        %384 = vmatpush1.msra.mxu0 0.0
        %385 = vmatprep.subr.mxu0 0.0
        %386 = vmatpush1.msra.mxu0 0.0
        %387 = vmatprep.subr.mxu0 0.0
        %388 = vmatpush1.msra.mxu0 0.0
        %389 = vmatprep.subr.mxu0 0.0
        %390 = vmatpush1.msra.mxu0 0.0
        %391 = vmatprep.mubr.f32.mxu0 0.0
        %392 = vmatmul.mubr.f32.gmra.mrb[0].mxu0 %v325
        %v393 = vpop.f32.mrb[0].mxu0
        %v394 = vadd.f32 %v321, %v393
        %v395 = vpop.f32.mrb[0].mxu0
        %396 = vdwg.mxu0
        %v397 = vmax.f32 %v394, 0.0
        %v398 = vmul.f32 %v397, %v224
        %vm399 = vcmask 80896
        %400 = vst.msk [vmem:[%s215] sm:$0xff] %vm399, %v398
        %s401 = sand.u32 %s137, 1
        %s402 = scalar_lea.sflag [#allocation3], %s401
        %s403 = sand.u32 %s137, 1
        %s404 = smul.addr %s403, 8
        %s405 = scalar_lea.vmem [#allocation2], %s404
        // Predicated region
        $region41: #{tpu_custom_call.1} parent=39 // pred_check
          %p406 = pneg %p147
        $region42: #{tpu_custom_call.1} parent=39 // pred_check_branch
          %408 = sbr.rel (%p406) target = $region44
        $region43: #{tpu_custom_call.1} parent=39 // pred_region
          %s410 = ssub.s32 128, 128
          %411 = vsyncadd %s402, %s410
          %s412 = smul.addr %s19, 128
          %s413 = scalar_lea.hbm %s5, %s412
          %s415 = sshll.u32 %s405, 4
          %s416 = int_to_ptr.vmem [resolvable:$true] %s415
          %418 = dma.vmem_to_hbm [thread:$0]  %s416, 128, %s413, %s402
        $region44: #{tpu_custom_call.1} parent=39 // pred_fallthru
          _
      $region40: #{tpu_custom_call.1} parent=5 // pred_fallthru
        _
      %p419 = scmp.le.s32.totalorder 2, %s14
      // Predicated region
      $region45: #{tpu_custom_call.1} parent=5 // pred_check
        %p420 = pneg %p419
      $region46: #{tpu_custom_call.1} parent=5 // pred_check_branch
        %422 = sbr.rel (%p420) target = $region48
      $region47: #{tpu_custom_call.1} parent=5 // pred_region
        %s423 = ssub.s32 %s14, 2
        // Predicated region
        $region49: #{tpu_custom_call.1} parent=47 // pred_check
          %p424 = pneg %p153
        $region50: #{tpu_custom_call.1} parent=47 // pred_check_branch
          %426 = sbr.rel (%p424) target = $region52
        $region51: #{tpu_custom_call.1} parent=47 // pred_region
          %s427 = sand.u32 %s138, 1
          %s428 = scalar_lea.sflag [#allocation3], %s427
          %s429 = sand.u32 %s138, 1
          %s430 = smul.addr %s429, 8
          %s431 = scalar_lea.vmem [#allocation2], %s430
          %432 = dma.done %s428, 128
        $region52: #{tpu_custom_call.1} parent=47 // pred_fallthru
          _
      $region48: #{tpu_custom_call.1} parent=5 // pred_fallthru
        _
    $region6: #{tpu_custom_call.1} parent=1 // loop_footer
      %s18 = sadd.s32 1, %s14
    $region7: #{tpu_custom_call.1} parent=1 // loop_footer_branch
      %13 = sbr.rel target = $region3
    $region8: #{tpu_custom_call.1} parent=1 // loop_exit
      _
    %433 = vsyncpa [#allocation3], 1
    %s434 = scalar_lea.sflag [#allocation3], 1
    %435 = vsyncpa %s434, 1

</llo_original>
